<compile_context>
chip_gen: v7x
topology: tpu7x:2x2x1
jax: 0.10.0
libtpu: 0.0.40
codegen_flags: <defaults>
</compile_context>

<pallas_src>
import jax
import jax.numpy as jnp
from jax.experimental import pallas as pl
from jax.experimental.pallas import tpu as pltpu

# ---------------------------------------------------------------------------
# problem sizes (small, consistent with the module)
# ---------------------------------------------------------------------------
N, H, W = 2, 16, 16
C_IN = 4
C_MID = 6          # intermediate_channels
C_OUT = 8          # out_channels
K = 3              # kernel_size
BN_EPS = 1e-5

NM = N * H * W              # samples per channel = 512 (lane axis in-kernel)
KDIM = K * K * C_IN         # im2col contraction dim = 36
KDIM_PAD = 40               # padded to a multiple of 8 sublanes (row 36 = ones)
C_MID_PAD = 8               # intermediate channels padded 6 -> 8
SLAB_W = 64                 # packed-parameter slab width

# slab column layout: [ w1t(0:40) | w2t(40:48) | I8(48:56) | gamma(56) |
#                       beta(57) | b2(58) | zero pad(59:64) ]


def rpcombi_kernel(pt_ref, slab_ref, out_ref):
    """Whole forward pass in one invocation (channels-major layout).

    pt_ref   : (KDIM_PAD, NM)   im2col patches, channels-major; row 36 = ones
    slab_ref : (C_MID_PAD, SLAB_W) packed small operands (see layout above)
    out_ref  : (C_OUT, NM)      output, channels-major (lane-dense stores)
    """
    w1t = slab_ref[:, 0:KDIM_PAD]                      # (8, 40) incl. b1 col 36
    w2t = slab_ref[:, KDIM_PAD:KDIM_PAD + C_MID_PAD]   # (8, 8)  (C_OUT, C_MID_PAD)
    eye8 = slab_ref[:, 48:56]                          # (8, 8)  identity
    gamma = slab_ref[:, 56:57]                         # (8, 1)
    beta = slab_ref[:, 57:58]                          # (8, 1)
    b2 = slab_ref[:, 58:59]                            # (8, 1)

    # ---- 3x3 'same' conv (bias folded via the ones row) + ReLU #1 ----
    y = jnp.maximum(
        jnp.dot(w1t, pt_ref[...], preferred_element_type=jnp.float32), 0.0)

    # ---- BatchNorm2d training-mode stats over all N*H*W, one fused pass ----
    # E[x^2]-mean^2 is fine at 512 unit-scale samples / eps=1e-5; switch to a
    # two-pass / Welford form if inputs stop being unit-scale Gaussians.
    inv_m = 1.0 / float(NM)
    s1 = jnp.sum(y, axis=1, keepdims=True)             # (C_MID_PAD, 1)
    s2 = jnp.sum(y * y, axis=1, keepdims=True)
    mean = s1 * inv_m
    var = s2 * inv_m - mean * mean                     # biased variance
    scale = gamma * jax.lax.rsqrt(var + BN_EPS)        # (C_MID_PAD, 1)
    shift = beta - mean * scale                        # (C_MID_PAD, 1)

    # ---- BN affine folded into the TINY 1x1-conv operands (y untouched) ----
    # z = w2^T ((y - mean)*gamma/sqrt(var+eps) + beta) + b2
    #   = (w2^T diag(scale)) y + (w2^T shift + b2)
    w2s = jnp.dot(w2t, eye8 * scale,
                  preferred_element_type=jnp.float32)             # (C_OUT, 8)
    bias = jnp.dot(w2t, shift,
                   preferred_element_type=jnp.float32) + b2       # (C_OUT, 1)

    z = jnp.dot(w2s, y, preferred_element_type=jnp.float32) + bias
    out_ref[...] = jnp.maximum(z, 0.0)   # full, unmasked lane-dense stores


def rpcombi_forward(x_nchw, w1, b1, gamma, beta, w2, b2):
    """x_nchw: (N, C_IN, H, W) float32 -> (N, C_OUT, H, W) float32."""
    pad = K // 2
    xpad = jnp.pad(x_nchw, ((0, 0), (0, 0), (pad, pad), (pad, pad)))
    xpad_cf = jnp.transpose(xpad, (1, 0, 2, 3))        # (C_IN, N, Hp, Wp) ~5KB

    # im2col built directly in (KDIM_PAD, NM) channels-major layout: each 3x3
    # tap contributes a (C_IN, NM) slice; row 36 is the ones row carrying b1.
    taps = [xpad_cf[:, :, dh:dh + H, dw:dw + W].reshape(C_IN, NM)
            for dh in range(K) for dw in range(K)]
    patches_t = jnp.concatenate(
        taps + [jnp.ones((1, NM), jnp.float32),
                jnp.zeros((KDIM_PAD - KDIM - 1, NM), jnp.float32)],
        axis=0)                                        # (40, NM)

    # 3x3 weights HWIO -> (C_MID, KDIM); append b1 as column 36; pad to (8,40).
    w1_rows = jnp.transpose(w1.reshape(KDIM, C_MID))               # (6, 36)
    w1_aug = jnp.concatenate([w1_rows, b1[:, None]], axis=1)       # (6, 37)
    w1t = jnp.pad(w1_aug,
                  ((0, C_MID_PAD - C_MID), (0, KDIM_PAD - (KDIM + 1))))  # (8,40)

    # 1x1 weights (C_MID, C_OUT): zero-pad input axis, transpose -> (8, 8).
    w2t = jnp.pad(w2, ((0, C_MID_PAD - C_MID), (0, 0))).T

    # Pack every small operand into one (8, 64) slab -> a single DMA.
    padc = lambda v: jnp.pad(v, (0, C_MID_PAD - C_MID))
    slab = jnp.concatenate([
        w1t,                                              # cols  0:40
        w2t,                                              # cols 40:48
        jnp.eye(C_MID_PAD, dtype=jnp.float32),            # cols 48:56
        padc(gamma)[:, None],                             # col  56
        padc(beta)[:, None],                              # col  57
        b2[:, None],                                      # col  58
        jnp.zeros((C_MID_PAD, SLAB_W - 59), jnp.float32), # cols 59:64
    ], axis=1)                                            # (8, 64)

    out_t = pl.pallas_call(
        rpcombi_kernel,
        out_shape=jax.ShapeDtypeStruct((C_OUT, NM), jnp.float32),
        in_specs=[pl.BlockSpec(memory_space=pltpu.MemorySpace.VMEM),
                  pl.BlockSpec(memory_space=pltpu.MemorySpace.VMEM)],
        out_specs=pl.BlockSpec(memory_space=pltpu.MemorySpace.VMEM),
        cost_estimate=pl.CostEstimate(
            flops=2 * C_MID_PAD * KDIM_PAD * NM + 2 * C_OUT * C_MID_PAD * NM,
            transcendentals=C_MID_PAD,
            bytes_accessed=(KDIM_PAD * NM + C_OUT * NM + C_MID_PAD * SLAB_W) * 4,
        ),
    )(patches_t, slab)

    # Small reshape + transpose back to NCHW.
    return jnp.transpose(out_t.reshape(C_OUT, N, H, W), (1, 0, 2, 3))


def rpcombi_reference(x_nchw, w1, b1, gamma, beta, w2, b2):
    """Pure-JAX reference for verification (BatchNorm2d training-mode stats)."""
    y = jax.lax.conv_general_dilated(
        x_nchw, w1, window_strides=(1, 1), padding="SAME",
        dimension_numbers=("NCHW", "HWIO", "NCHW"))
    y = y + b1.reshape(1, C_MID, 1, 1)
    y = jnp.maximum(y, 0.0)
    mean = jnp.mean(y, axis=(0, 2, 3), keepdims=True)
    var = jnp.mean((y - mean) ** 2, axis=(0, 2, 3), keepdims=True)
    y = (y - mean) * jax.lax.rsqrt(var + BN_EPS)
    y = y * gamma.reshape(1, C_MID, 1, 1) + beta.reshape(1, C_MID, 1, 1)
    z = jnp.einsum("nchw,cd->ndhw", y, w2) + b2.reshape(1, C_OUT, 1, 1)
    return jnp.maximum(z, 0.0)


if __name__ == "__main__":
    key = jax.random.PRNGKey(0)
    k_x, k_w1, k_b1, k_g, k_be, k_w2, k_b2 = jax.random.split(key, 7)

    # deterministic synthetic parameters (shapes per the module's __init__)
    x = jax.random.normal(k_x, (N, C_IN, H, W), jnp.float32)
    w1 = jax.random.normal(k_w1, (K, K, C_IN, C_MID), jnp.float32) * 0.1
    b1 = jax.random.normal(k_b1, (C_MID,), jnp.float32) * 0.1
    gamma = 1.0 + 0.1 * jax.random.normal(k_g, (C_MID,), jnp.float32)
    beta = 0.1 * jax.random.normal(k_be, (C_MID,), jnp.float32)
    w2 = jax.random.normal(k_w2, (C_MID, C_OUT), jnp.float32) * 0.1
    b2 = jax.random.normal(k_b2, (C_OUT,), jnp.float32) * 0.1

    fwd = jax.jit(rpcombi_forward)
    out = jax.block_until_ready(fwd(x, w1, b1, gamma, beta, w2, b2))

    ref = rpcombi_reference(x, w1, b1, gamma, beta, w2, b2)
    assert out.shape == (N, C_OUT, H, W)
    assert jnp.allclose(out, ref, rtol=1e-4, atol=1e-4), "mismatch vs reference"

    print("KERNEL_OK")
</pallas_src>

<mosaic_0001>
module attributes {stable_mosaic.version = 11 : i64} {
  func.func @rpcombi_kernel(%arg0: memref<40x512xf32, #tpu.memory_space<vmem>>, %arg1: memref<8x64xf32, #tpu.memory_space<vmem>>, %arg2: memref<8x512xf32, #tpu.memory_space<vmem>>) attributes {dimension_semantics = [], scalar_prefetch = 0 : i64, scratch_operands = 0 : i64, tpu.core_type = #tpu.core_type<tc>} {
    %c0 = arith.constant 0 : index
    %c0_0 = arith.constant 0 : index
    %0 = vector.load %arg1[%c0, %c0_0] : memref<8x64xf32, #tpu.memory_space<vmem>>, vector<8x40xf32>
    %c0_1 = arith.constant 0 : index
    %c40 = arith.constant 40 : index
    %1 = vector.load %arg1[%c0_1, %c40] : memref<8x64xf32, #tpu.memory_space<vmem>>, vector<8x8xf32>
    %c0_2 = arith.constant 0 : index
    %c48 = arith.constant 48 : index
    %2 = vector.load %arg1[%c0_2, %c48] : memref<8x64xf32, #tpu.memory_space<vmem>>, vector<8x8xf32>
    %c0_3 = arith.constant 0 : index
    %c56 = arith.constant 56 : index
    %3 = vector.load %arg1[%c0_3, %c56] : memref<8x64xf32, #tpu.memory_space<vmem>>, vector<8x1xf32>
    %c0_4 = arith.constant 0 : index
    %c57 = arith.constant 57 : index
    %4 = vector.load %arg1[%c0_4, %c57] : memref<8x64xf32, #tpu.memory_space<vmem>>, vector<8x1xf32>
    %c0_5 = arith.constant 0 : index
    %c58 = arith.constant 58 : index
    %5 = vector.load %arg1[%c0_5, %c58] : memref<8x64xf32, #tpu.memory_space<vmem>>, vector<8x1xf32>
    %c0_6 = arith.constant 0 : index
    %c0_7 = arith.constant 0 : index
    %6 = vector.load %arg0[%c0_6, %c0_7] : memref<40x512xf32, #tpu.memory_space<vmem>>, vector<40x512xf32>
    %cst = arith.constant dense<0.000000e+00> : vector<8x512xf32>
    %7 = tpu.matmul %0, %6, %cst {dimension_numbers = #tpu.dot_dimension_numbers<[1], [0], [0], [1], [0, 0, 1, 1], [], []>} : vector<8x40xf32>, vector<40x512xf32>, vector<8x512xf32> -> vector<8x512xf32>
    %cst_8 = arith.constant 0.000000e+00 : f32
    %8 = vector.broadcast %cst_8 : f32 to vector<8x512xf32>
    %9 = arith.maximumf %7, %8 : vector<8x512xf32>
    %cst_9 = arith.constant dense<0.000000e+00> : vector<8xf32>
    %10 = vector.multi_reduction <add>, %9, %cst_9 [1] : vector<8x512xf32> to vector<8xf32>
    %11 = vector.shape_cast %10 : vector<8xf32> to vector<8x1xf32>
    %12 = arith.mulf %9, %9 : vector<8x512xf32>
    %cst_10 = arith.constant dense<0.000000e+00> : vector<8xf32>
    %13 = vector.multi_reduction <add>, %12, %cst_10 [1] : vector<8x512xf32> to vector<8xf32>
    %14 = vector.shape_cast %13 : vector<8xf32> to vector<8x1xf32>
    %cst_11 = arith.constant 0.001953125 : f32
    %15 = vector.broadcast %cst_11 : f32 to vector<8x1xf32>
    %16 = arith.mulf %11, %15 : vector<8x1xf32>
    %cst_12 = arith.constant 0.001953125 : f32
    %17 = vector.broadcast %cst_12 : f32 to vector<8x1xf32>
    %18 = arith.mulf %14, %17 : vector<8x1xf32>
    %19 = arith.mulf %16, %16 : vector<8x1xf32>
    %20 = arith.subf %18, %19 : vector<8x1xf32>
    %cst_13 = arith.constant 9.99999974E-6 : f32
    %21 = vector.broadcast %cst_13 : f32 to vector<8x1xf32>
    %22 = arith.addf %20, %21 : vector<8x1xf32>
    %23 = math.rsqrt %22 : vector<8x1xf32>
    %24 = arith.mulf %3, %23 : vector<8x1xf32>
    %25 = arith.mulf %16, %24 : vector<8x1xf32>
    %26 = arith.subf %4, %25 : vector<8x1xf32>
    %27 = vector.broadcast %24 : vector<8x1xf32> to vector<8x8xf32>
    %28 = arith.mulf %2, %27 : vector<8x8xf32>
    %cst_14 = arith.constant dense<0.000000e+00> : vector<8x8xf32>
    %29 = tpu.matmul %1, %28, %cst_14 {dimension_numbers = #tpu.dot_dimension_numbers<[1], [0], [0], [1], [0, 0, 1, 1], [], []>} : vector<8x8xf32>, vector<8x8xf32>, vector<8x8xf32> -> vector<8x8xf32>
    %cst_15 = arith.constant dense<0.000000e+00> : vector<8x1xf32>
    %30 = tpu.matmul %1, %26, %cst_15 {dimension_numbers = #tpu.dot_dimension_numbers<[1], [0], [0], [1], [0, 0, 1, 1], [], []>} : vector<8x8xf32>, vector<8x1xf32>, vector<8x1xf32> -> vector<8x1xf32>
    %31 = arith.addf %30, %5 : vector<8x1xf32>
    %cst_16 = arith.constant dense<0.000000e+00> : vector<8x512xf32>
    %32 = tpu.matmul %29, %9, %cst_16 {dimension_numbers = #tpu.dot_dimension_numbers<[1], [0], [0], [1], [0, 0, 1, 1], [], []>} : vector<8x8xf32>, vector<8x512xf32>, vector<8x512xf32> -> vector<8x512xf32>
    %33 = vector.broadcast %31 : vector<8x1xf32> to vector<8x512xf32>
    %34 = arith.addf %32, %33 : vector<8x512xf32>
    %cst_17 = arith.constant 0.000000e+00 : f32
    %35 = vector.broadcast %cst_17 : f32 to vector<8x512xf32>
    %36 = arith.maximumf %34, %35 : vector<8x512xf32>
    %c0_18 = arith.constant 0 : index
    %c0_19 = arith.constant 0 : index
    %37 = vector.load %arg2[%c0_18, %c0_19] : memref<8x512xf32, #tpu.memory_space<vmem>>, vector<8x512xf32>
    tpu.vector_store %arg2[%c0_18, %c0_19], %36 {strides = array<i32>} : memref<8x512xf32, #tpu.memory_space<vmem>>, vector<8x512xf32>,
    return
  }
}

</mosaic_0001>

<llo_original>
// kernel: rpcombi_forward.1
$region0: #{rpcombi_forward.1}
  #allocation0 [shape = 'u32[]', space=smem, size = 0x4, offset = 0x4, fixed_abs, tag = 'smem constant byte address 0x4 - core index']
  #allocation1 [shape = 'u32[144,128]{1,0:T(1,128)}', space=vmem, size = 0x12000, scoped, tag = 'internal scratch']
  %s0 = inlined_call_operand.vmem [shape: f32[40,512], index: 0, kind: input, shape index: {}]
  %s1 = inlined_call_operand.vmem [shape: f32[8,64], index: 1, kind: input, shape index: {}]
  %s2 = inlined_call_operand.vmem [shape: f32[8,512], index: 2, kind: output, shape index: {}]
  %s3 = sld [smem:[#allocation0]]
  $region18: #{rpcombi_forward.1} parent=0
    _
  %s5 = ssub.s32 1, %s3
  %s6 = scalar_select 0, %s5, %s3
  // Predicated region
  $region2: #{rpcombi_forward.1} parent=0 // pred_check
    _
  $region3: #{rpcombi_forward.1} parent=0 // pred_check_branch
    %8 = sbr.rel (0) target = $region5
  $region4: #{rpcombi_forward.1} parent=0 // pred_region
    _
  $region5: #{rpcombi_forward.1} parent=0 // pred_fallthru
    _
  // Predicated region
  $region6: #{rpcombi_forward.1} parent=0 // pred_check
    _
  $region7: #{rpcombi_forward.1} parent=0 // pred_check_branch
    %10 = sbr.rel (0) target = $region9
  $region8: #{rpcombi_forward.1} parent=0 // pred_region
    _
  $region9: #{rpcombi_forward.1} parent=0 // pred_fallthru
    _
  %v11 = vld [vmem:[%s1] sm:$0xff]
  %v12 = vld [vmem:[%s0] sm:$0xff]
  %v13 = vld [vmem:[%s0 + $0x8] sm:$0xff]
  %v14 = vld [vmem:[%s0 + $0x10] sm:$0xff]
  %v15 = vld [vmem:[%s0 + $0x18] sm:$0xff]
  %v16 = vld [vmem:[%s0 + $0x20] sm:$0xff]
  %v17 = vld [vmem:[%s0 + $0x28] sm:$0xff]
  %v18 = vld [vmem:[%s0 + $0x30] sm:$0xff]
  %v19 = vld [vmem:[%s0 + $0x38] sm:$0xff]
  %v20 = vld [vmem:[%s0 + $0x40] sm:$0xff]
  %v21 = vld [vmem:[%s0 + $0x48] sm:$0xff]
  %v22 = vld [vmem:[%s0 + $0x50] sm:$0xff]
  %v23 = vld [vmem:[%s0 + $0x58] sm:$0xff]
  %v24 = vld [vmem:[%s0 + $0x60] sm:$0xff]
  %v25 = vld [vmem:[%s0 + $0x68] sm:$0xff]
  %v26 = vld [vmem:[%s0 + $0x70] sm:$0xff]
  %v27 = vld [vmem:[%s0 + $0x78] sm:$0xff]
  %v28 = vld [vmem:[%s0 + $0x80] sm:$0xff]
  %v29 = vld [vmem:[%s0 + $0x88] sm:$0xff]
  %v30 = vld [vmem:[%s0 + $0x90] sm:$0xff]
  %v31 = vld [vmem:[%s0 + $0x98] sm:$0xff]
  %vm32 = vcmask 326656
  %v34 = vsel %vm32, %v11, 0
  %36 = vmatprep.subr.mxu0 %v13
  %37 = vmatpush1.msra.mxu0 %v12
  %38 = vmatprep.subr.mxu0 %v17
  %39 = vmatpush1.msra.mxu0 %v16
  %40 = vmatprep.subr.mxu0 %v21
  %41 = vmatpush1.msra.mxu0 %v20
  %42 = vmatprep.subr.mxu0 %v25
  %43 = vmatpush1.msra.mxu0 %v24
  %44 = vmatprep.subr.mxu0 %v29
  %45 = vmatpush1.msra.mxu0 %v28
  %46 = vmatprep.subr.mxu0 0.0
  %47 = vmatpush1.msra.mxu0 0.0
  %48 = vmatprep.subr.mxu0 0.0
  %49 = vmatpush1.msra.mxu0 0.0
  %50 = vmatprep.subr.mxu0 0.0
  %51 = vmatpush1.msra.mxu0 0.0
  %52 = vmatprep.subr.mxu0 0.0
  %53 = vmatpush1.msra.mxu0 0.0
  %54 = vmatprep.subr.mxu0 0.0
  %55 = vmatpush1.msra.mxu0 0.0
  %56 = vmatprep.subr.mxu0 0.0
  %57 = vmatpush1.msra.mxu0 0.0
  %58 = vmatprep.subr.mxu0 0.0
  %59 = vmatpush1.msra.mxu0 0.0
  %60 = vmatprep.subr.mxu0 0.0
  %61 = vmatpush1.msra.mxu0 0.0
  %62 = vmatprep.subr.mxu0 0.0
  %63 = vmatpush1.msra.mxu0 0.0
  %64 = vmatprep.subr.mxu0 0.0
  %65 = vmatpush1.msra.mxu0 0.0
  %66 = vmatprep.subr.mxu0 0.0
  %67 = vmatpush1.msra.mxu0 0.0
  %68 = vmatprep.subr.mxu0 0.0
  %69 = vmatpush1.msra.mxu0 0.0
  %70 = vmatprep.subr.mxu0 0.0
  %71 = vmatpush1.msra.mxu0 0.0
  %72 = vmatprep.subr.mxu0 0.0
  %73 = vmatpush1.msra.mxu0 0.0
  %74 = vmatprep.subr.mxu0 0.0
  %75 = vmatpush1.msra.mxu0 0.0
  %76 = vmatprep.subr.mxu0 0.0
  %77 = vmatpush1.msra.mxu0 0.0
  %78 = vmatprep.subr.mxu0 0.0
  %79 = vmatpush1.msra.mxu0 0.0
  %80 = vmatprep.subr.mxu0 0.0
  %81 = vmatpush1.msra.mxu0 0.0
  %82 = vmatprep.subr.mxu0 0.0
  %83 = vmatpush1.msra.mxu0 0.0
  %84 = vmatprep.subr.mxu0 0.0
  %85 = vmatpush1.msra.mxu0 0.0
  %86 = vmatprep.subr.mxu0 0.0
  %87 = vmatpush1.msra.mxu0 0.0
  %88 = vmatprep.subr.mxu0 0.0
  %89 = vmatpush1.msra.mxu0 0.0
  %90 = vmatprep.subr.mxu0 0.0
  %91 = vmatpush1.msra.mxu0 0.0
  %92 = vmatprep.subr.mxu0 0.0
  %93 = vmatpush1.msra.mxu0 0.0
  %94 = vmatprep.subr.mxu0 0.0
  %95 = vmatpush1.msra.mxu0 0.0
  %96 = vmatprep.subr.mxu0 0.0
  %97 = vmatpush1.msra.mxu0 0.0
  %98 = vmatprep.subr.mxu0 0.0
  %99 = vmatpush1.msra.mxu0 0.0
  %100 = vmatprep.mubr.f32.mxu0 0.0
  %101 = vmatmul.mubr.f32.gmra.mrb[0].mxu0 %v34
  %v102 = vpop.f32.mrb[0].mxu0
  %v103 = vadd.f32 0.0, %v102
  %v104 = vpop.f32.mrb[0].mxu0
  %v105 = vadd.f32 0.0, %v104
  %106 = vdwg.mxu0
  %107 = vmatprep.subr.mxu0 %v15
  %108 = vmatpush1.msra.mxu0 %v14
  %109 = vmatprep.subr.mxu0 %v19
  %110 = vmatpush1.msra.mxu0 %v18
  %111 = vmatprep.subr.mxu0 %v23
  %112 = vmatpush1.msra.mxu0 %v22
  %113 = vmatprep.subr.mxu0 %v27
  %114 = vmatpush1.msra.mxu0 %v26
  %115 = vmatprep.subr.mxu0 %v31
  %116 = vmatpush1.msra.mxu0 %v30
  %117 = vmatprep.subr.mxu0 0.0
  %118 = vmatpush1.msra.mxu0 0.0
  %119 = vmatprep.subr.mxu0 0.0
  %120 = vmatpush1.msra.mxu0 0.0
  %121 = vmatprep.subr.mxu0 0.0
  %122 = vmatpush1.msra.mxu0 0.0
  %123 = vmatprep.subr.mxu0 0.0
  %124 = vmatpush1.msra.mxu0 0.0
  %125 = vmatprep.subr.mxu0 0.0
  %126 = vmatpush1.msra.mxu0 0.0
  %127 = vmatprep.subr.mxu0 0.0
  %128 = vmatpush1.msra.mxu0 0.0
  %129 = vmatprep.subr.mxu0 0.0
  %130 = vmatpush1.msra.mxu0 0.0
  %131 = vmatprep.subr.mxu0 0.0
  %132 = vmatpush1.msra.mxu0 0.0
  %133 = vmatprep.subr.mxu0 0.0
  %134 = vmatpush1.msra.mxu0 0.0
  %135 = vmatprep.subr.mxu0 0.0
  %136 = vmatpush1.msra.mxu0 0.0
  %137 = vmatprep.subr.mxu0 0.0
  %138 = vmatpush1.msra.mxu0 0.0
  %139 = vmatprep.subr.mxu0 0.0
  %140 = vmatpush1.msra.mxu0 0.0
  %141 = vmatprep.subr.mxu0 0.0
  %142 = vmatpush1.msra.mxu0 0.0
  %143 = vmatprep.subr.mxu0 0.0
  %144 = vmatpush1.msra.mxu0 0.0
  %145 = vmatprep.subr.mxu0 0.0
  %146 = vmatpush1.msra.mxu0 0.0
  %147 = vmatprep.subr.mxu0 0.0
  %148 = vmatpush1.msra.mxu0 0.0
  %149 = vmatprep.subr.mxu0 0.0
  %150 = vmatpush1.msra.mxu0 0.0
  %151 = vmatprep.subr.mxu0 0.0
  %152 = vmatpush1.msra.mxu0 0.0
  %153 = vmatprep.subr.mxu0 0.0
  %154 = vmatpush1.msra.mxu0 0.0
  %155 = vmatprep.subr.mxu0 0.0
  %156 = vmatpush1.msra.mxu0 0.0
  %157 = vmatprep.subr.mxu0 0.0
  %158 = vmatpush1.msra.mxu0 0.0
  %159 = vmatprep.subr.mxu0 0.0
  %160 = vmatpush1.msra.mxu0 0.0
  %161 = vmatprep.subr.mxu0 0.0
  %162 = vmatpush1.msra.mxu0 0.0
  %163 = vmatprep.subr.mxu0 0.0
  %164 = vmatpush1.msra.mxu0 0.0
  %165 = vmatprep.subr.mxu0 0.0
  %166 = vmatpush1.msra.mxu0 0.0
  %167 = vmatprep.subr.mxu0 0.0
  %168 = vmatpush1.msra.mxu0 0.0
  %169 = vmatprep.subr.mxu0 0.0
  %170 = vmatpush1.msra.mxu0 0.0
  %171 = vmatprep.mubr.f32.mxu0 0.0
  %172 = vmatmul.mubr.f32.gmra.mrb[0].mxu0 %v34
  %v173 = vpop.f32.mrb[0].mxu0
  %v174 = vadd.f32 0.0, %v173
  %v175 = vpop.f32.mrb[0].mxu0
  %v176 = vadd.f32 0.0, %v175
  %177 = vdwg.mxu0
  %v178 = vmax.f32 %v103, 0.0
  %v179 = vmax.f32 %v105, 0.0
  %v180 = vmax.f32 %v174, 0.0
  %v181 = vmax.f32 %v176, 0.0
  %v182 = vadd.f32 %v178, %v179
  %v183 = vadd.f32 %v182, %v180
  %v184 = vadd.f32 %v183, %v181
  %185 = vadd.xlane.f32.xlu0 %v184
  %v186 = vpop.xlane.xlu0 %185
  %v187 = vmul.f32 %v178, %v178
  %v188 = vmul.f32 %v179, %v179
  %v189 = vmul.f32 %v180, %v180
  %v190 = vmul.f32 %v181, %v181
  %v191 = vadd.f32 %v187, %v188
  %v192 = vadd.f32 %v191, %v189
  %v193 = vadd.f32 %v192, %v190
  %194 = vadd.xlane.f32.xlu0 %v193
  %v195 = vpop.xlane.xlu0 %194
  %v196 = vmul.f32 %v186, 0.001953125
  %v197 = vmul.f32 %v195, 0.001953125
  %v198 = vmul.f32 %v196, %v196
  %v199 = vsub.f32 %v197, %v198
  %v200 = vadd.f32 %v199, 1e-05
  %v201 = vrsqrt.pop %v200
  %v202 = vmul.f32 %v11, %v201
  %v203 = vmul.f32 %v196, %v202
  %205 = vrot.lane.b32.xlu0 %v203, 1
  %v206 = vpop.permute.xlu0 %205
  %v208 = vsub.f32 %v11, %v206
  %210 = vset.pattern.permute.xlu0 56
  %211 = vperm.xlu0 %210, %v202
  %v212 = vpop.permute.xlu0 %211
  %v214 = vmul.f32 %v11, %v212
  %215 = vrot.lane.b32.xlu0 %v11, 88
  %v216 = vpop.permute.xlu0 %215
  %218 = vrot.lane.b32.xlu0 %v214, 80
  %v219 = vpop.permute.xlu0 %218
  %vm221 = vcmask 64512
  %v222 = vsel %vm221, %v216, 0
  %224 = vmatprep.subr.mxu0 0.0
  %225 = vmatpush1.msra.mxu0 %v219
  %226 = vmatprep.subr.mxu0 0.0
  %227 = vmatpush1.msra.mxu0 0.0
  %228 = vmatprep.subr.mxu0 0.0
  %229 = vmatpush1.msra.mxu0 0.0
  %230 = vmatprep.subr.mxu0 0.0
  %231 = vmatpush1.msra.mxu0 0.0
  %232 = vmatprep.subr.mxu0 0.0
  %233 = vmatpush1.msra.mxu0 0.0
  %234 = vmatprep.subr.mxu0 0.0
  %235 = vmatpush1.msra.mxu0 0.0
  %236 = vmatprep.subr.mxu0 0.0
  %237 = vmatpush1.msra.mxu0 0.0
  %238 = vmatprep.subr.mxu0 0.0
  %239 = vmatpush1.msra.mxu0 0.0
  %240 = vmatprep.subr.mxu0 0.0
  %241 = vmatpush1.msra.mxu0 0.0
  %242 = vmatprep.subr.mxu0 0.0
  %243 = vmatpush1.msra.mxu0 0.0
  %244 = vmatprep.subr.mxu0 0.0
  %245 = vmatpush1.msra.mxu0 0.0
  %246 = vmatprep.subr.mxu0 0.0
  %247 = vmatpush1.msra.mxu0 0.0
  %248 = vmatprep.subr.mxu0 0.0
  %249 = vmatpush1.msra.mxu0 0.0
  %250 = vmatprep.subr.mxu0 0.0
  %251 = vmatpush1.msra.mxu0 0.0
  %252 = vmatprep.subr.mxu0 0.0
  %253 = vmatpush1.msra.mxu0 0.0
  %254 = vmatprep.subr.mxu0 0.0
  %255 = vmatpush1.msra.mxu0 0.0
  %256 = vmatprep.subr.mxu0 0.0
  %257 = vmatpush1.msra.mxu0 0.0
  %258 = vmatprep.subr.mxu0 0.0
  %259 = vmatpush1.msra.mxu0 0.0
  %260 = vmatprep.subr.mxu0 0.0
  %261 = vmatpush1.msra.mxu0 0.0
  %262 = vmatprep.subr.mxu0 0.0
  %263 = vmatpush1.msra.mxu0 0.0
  %264 = vmatprep.subr.mxu0 0.0
  %265 = vmatpush1.msra.mxu0 0.0
  %266 = vmatprep.subr.mxu0 0.0
  %267 = vmatpush1.msra.mxu0 0.0
  %268 = vmatprep.subr.mxu0 0.0
  %269 = vmatpush1.msra.mxu0 0.0
  %270 = vmatprep.subr.mxu0 0.0
  %271 = vmatpush1.msra.mxu0 0.0
  %272 = vmatprep.subr.mxu0 0.0
  %273 = vmatpush1.msra.mxu0 0.0
  %274 = vmatprep.subr.mxu0 0.0
  %275 = vmatpush1.msra.mxu0 0.0
  %276 = vmatprep.subr.mxu0 0.0
  %277 = vmatpush1.msra.mxu0 0.0
  %278 = vmatprep.subr.mxu0 0.0
  %279 = vmatpush1.msra.mxu0 0.0
  %280 = vmatprep.subr.mxu0 0.0
  %281 = vmatpush1.msra.mxu0 0.0
  %282 = vmatprep.subr.mxu0 0.0
  %283 = vmatpush1.msra.mxu0 0.0
  %284 = vmatprep.subr.mxu0 0.0
  %285 = vmatpush1.msra.mxu0 0.0
  %286 = vmatprep.subr.mxu0 0.0
  %287 = vmatpush1.msra.mxu0 0.0
  %288 = vmatprep.mubr.f32.mxu0 0.0
  %289 = vmatmul.mubr.f32.gmra.mrb[0].mxu0 %v222
  %v290 = vpop.f32.mrb[0].mxu0
  %v291 = vadd.f32 0.0, %v290
  %v292 = vpop.f32.mrb[0].mxu0
  %293 = vdwg.mxu0
  %295 = vrot.lane.b32.xlu0 %v208, 71
  %v296 = vpop.permute.xlu0 %295
  %298 = vrot.lane.b32.xlu0 %v11, 70
  %v299 = vpop.permute.xlu0 %298
  %301 = vmatprep.subr.mxu0 0.0
  %302 = vmatpush1.msra.mxu0 %v296
  %303 = vmatprep.subr.mxu0 0.0
  %304 = vmatpush1.msra.mxu0 0.0
  %305 = vmatprep.subr.mxu0 0.0
  %306 = vmatpush1.msra.mxu0 0.0
  %307 = vmatprep.subr.mxu0 0.0
  %308 = vmatpush1.msra.mxu0 0.0
  %309 = vmatprep.subr.mxu0 0.0
  %310 = vmatpush1.msra.mxu0 0.0
  %311 = vmatprep.subr.mxu0 0.0
  %312 = vmatpush1.msra.mxu0 0.0
  %313 = vmatprep.subr.mxu0 0.0
  %314 = vmatpush1.msra.mxu0 0.0
  %315 = vmatprep.subr.mxu0 0.0
  %316 = vmatpush1.msra.mxu0 0.0
  %317 = vmatprep.subr.mxu0 0.0
  %318 = vmatpush1.msra.mxu0 0.0
  %319 = vmatprep.subr.mxu0 0.0
  %320 = vmatpush1.msra.mxu0 0.0
  %321 = vmatprep.subr.mxu0 0.0
  %322 = vmatpush1.msra.mxu0 0.0
  %323 = vmatprep.subr.mxu0 0.0
  %324 = vmatpush1.msra.mxu0 0.0
  %325 = vmatprep.subr.mxu0 0.0
  %326 = vmatpush1.msra.mxu0 0.0
  %327 = vmatprep.subr.mxu0 0.0
  %328 = vmatpush1.msra.mxu0 0.0
  %329 = vmatprep.subr.mxu0 0.0
  %330 = vmatpush1.msra.mxu0 0.0
  %331 = vmatprep.subr.mxu0 0.0
  %332 = vmatpush1.msra.mxu0 0.0
  %333 = vmatprep.subr.mxu0 0.0
  %334 = vmatpush1.msra.mxu0 0.0
  %335 = vmatprep.subr.mxu0 0.0
  %336 = vmatpush1.msra.mxu0 0.0
  %337 = vmatprep.subr.mxu0 0.0
  %338 = vmatpush1.msra.mxu0 0.0
  %339 = vmatprep.subr.mxu0 0.0
  %340 = vmatpush1.msra.mxu0 0.0
  %341 = vmatprep.subr.mxu0 0.0
  %342 = vmatpush1.msra.mxu0 0.0
  %343 = vmatprep.subr.mxu0 0.0
  %344 = vmatpush1.msra.mxu0 0.0
  %345 = vmatprep.subr.mxu0 0.0
  %346 = vmatpush1.msra.mxu0 0.0
  %347 = vmatprep.subr.mxu0 0.0
  %348 = vmatpush1.msra.mxu0 0.0
  %349 = vmatprep.subr.mxu0 0.0
  %350 = vmatpush1.msra.mxu0 0.0
  %351 = vmatprep.subr.mxu0 0.0
  %352 = vmatpush1.msra.mxu0 0.0
  %353 = vmatprep.subr.mxu0 0.0
  %354 = vmatpush1.msra.mxu0 0.0
  %355 = vmatprep.subr.mxu0 0.0
  %356 = vmatpush1.msra.mxu0 0.0
  %357 = vmatprep.subr.mxu0 0.0
  %358 = vmatpush1.msra.mxu0 0.0
  %359 = vmatprep.subr.mxu0 0.0
  %360 = vmatpush1.msra.mxu0 0.0
  %361 = vmatprep.subr.mxu0 0.0
  %362 = vmatpush1.msra.mxu0 0.0
  %363 = vmatprep.subr.mxu0 0.0
  %364 = vmatpush1.msra.mxu0 0.0
  %365 = vmatprep.mubr.f32.mxu0 0.0
  %366 = vmatmul.mubr.f32.gmra.mrb[0].mxu0 %v222
  %v367 = vpop.f32.mrb[0].mxu0
  %v368 = vadd.f32 %v299, %v367
  %v369 = vpop.f32.mrb[0].mxu0
  %370 = vdwg.mxu0
  %372 = vset.pattern.permute.xlu0 0
  %373 = vperm.xlu0 %372, %v368
  %v374 = vpop.permute.xlu0 %373
  %v377 = vsel %vm221, %v291, 0
  %379 = vmatprep.subr.mxu0 %v179
  %380 = vmatpush1.msra.mxu0 %v178
  %381 = vmatprep.subr.mxu0 0.0
  %382 = vmatpush1.msra.mxu0 0.0
  %383 = vmatprep.subr.mxu0 0.0
  %384 = vmatpush1.msra.mxu0 0.0
  %385 = vmatprep.subr.mxu0 0.0
  %386 = vmatpush1.msra.mxu0 0.0
  %387 = vmatprep.subr.mxu0 0.0
  %388 = vmatpush1.msra.mxu0 0.0
  %389 = vmatprep.subr.mxu0 0.0
  %390 = vmatpush1.msra.mxu0 0.0
  %391 = vmatprep.subr.mxu0 0.0
  %392 = vmatpush1.msra.mxu0 0.0
  %393 = vmatprep.subr.mxu0 0.0
  %394 = vmatpush1.msra.mxu0 0.0
  %395 = vmatprep.subr.mxu0 0.0
  %396 = vmatpush1.msra.mxu0 0.0
  %397 = vmatprep.subr.mxu0 0.0
  %398 = vmatpush1.msra.mxu0 0.0
  %399 = vmatprep.subr.mxu0 0.0
  %400 = vmatpush1.msra.mxu0 0.0
  %401 = vmatprep.subr.mxu0 0.0
  %402 = vmatpush1.msra.mxu0 0.0
  %403 = vmatprep.subr.mxu0 0.0
  %404 = vmatpush1.msra.mxu0 0.0
  %405 = vmatprep.subr.mxu0 0.0
  %406 = vmatpush1.msra.mxu0 0.0
  %407 = vmatprep.subr.mxu0 0.0
  %408 = vmatpush1.msra.mxu0 0.0
  %409 = vmatprep.subr.mxu0 0.0
  %410 = vmatpush1.msra.mxu0 0.0
  %411 = vmatprep.subr.mxu0 0.0
  %412 = vmatpush1.msra.mxu0 0.0
  %413 = vmatprep.subr.mxu0 0.0
  %414 = vmatpush1.msra.mxu0 0.0
  %415 = vmatprep.subr.mxu0 0.0
  %416 = vmatpush1.msra.mxu0 0.0
  %417 = vmatprep.subr.mxu0 0.0
  %418 = vmatpush1.msra.mxu0 0.0
  %419 = vmatprep.subr.mxu0 0.0
  %420 = vmatpush1.msra.mxu0 0.0
  %421 = vmatprep.subr.mxu0 0.0
  %422 = vmatpush1.msra.mxu0 0.0
  %423 = vmatprep.subr.mxu0 0.0
  %424 = vmatpush1.msra.mxu0 0.0
  %425 = vmatprep.subr.mxu0 0.0
  %426 = vmatpush1.msra.mxu0 0.0
  %427 = vmatprep.subr.mxu0 0.0
  %428 = vmatpush1.msra.mxu0 0.0
  %429 = vmatprep.subr.mxu0 0.0
  %430 = vmatpush1.msra.mxu0 0.0
  %431 = vmatprep.subr.mxu0 0.0
  %432 = vmatpush1.msra.mxu0 0.0
  %433 = vmatprep.subr.mxu0 0.0
  %434 = vmatpush1.msra.mxu0 0.0
  %435 = vmatprep.subr.mxu0 0.0
  %436 = vmatpush1.msra.mxu0 0.0
  %437 = vmatprep.subr.mxu0 0.0
  %438 = vmatpush1.msra.mxu0 0.0
  %439 = vmatprep.subr.mxu0 0.0
  %440 = vmatpush1.msra.mxu0 0.0
  %441 = vmatprep.subr.mxu0 0.0
  %442 = vmatpush1.msra.mxu0 0.0
  %443 = vmatprep.mubr.f32.mxu0 0.0
  %444 = vmatmul.mubr.f32.gmra.mrb[0].mxu0 %v377
  %v445 = vpop.f32.mrb[0].mxu0
  %v446 = vadd.f32 %v374, %v445
  %v447 = vpop.f32.mrb[0].mxu0
  %v448 = vadd.f32 %v374, %v447
  %449 = vdwg.mxu0
  %450 = vmatprep.subr.mxu0 %v181
  %451 = vmatpush1.msra.mxu0 %v180
  %452 = vmatprep.subr.mxu0 0.0
  %453 = vmatpush1.msra.mxu0 0.0
  %454 = vmatprep.subr.mxu0 0.0
  %455 = vmatpush1.msra.mxu0 0.0
  %456 = vmatprep.subr.mxu0 0.0
  %457 = vmatpush1.msra.mxu0 0.0
  %458 = vmatprep.subr.mxu0 0.0
  %459 = vmatpush1.msra.mxu0 0.0
  %460 = vmatprep.subr.mxu0 0.0
  %461 = vmatpush1.msra.mxu0 0.0
  %462 = vmatprep.subr.mxu0 0.0
  %463 = vmatpush1.msra.mxu0 0.0
  %464 = vmatprep.subr.mxu0 0.0
  %465 = vmatpush1.msra.mxu0 0.0
  %466 = vmatprep.subr.mxu0 0.0
  %467 = vmatpush1.msra.mxu0 0.0
  %468 = vmatprep.subr.mxu0 0.0
  %469 = vmatpush1.msra.mxu0 0.0
  %470 = vmatprep.subr.mxu0 0.0
  %471 = vmatpush1.msra.mxu0 0.0
  %472 = vmatprep.subr.mxu0 0.0
  %473 = vmatpush1.msra.mxu0 0.0
  %474 = vmatprep.subr.mxu0 0.0
  %475 = vmatpush1.msra.mxu0 0.0
  %476 = vmatprep.subr.mxu0 0.0
  %477 = vmatpush1.msra.mxu0 0.0
  %478 = vmatprep.subr.mxu0 0.0
  %479 = vmatpush1.msra.mxu0 0.0
  %480 = vmatprep.subr.mxu0 0.0
  %481 = vmatpush1.msra.mxu0 0.0
  %482 = vmatprep.subr.mxu0 0.0
  %483 = vmatpush1.msra.mxu0 0.0
  %484 = vmatprep.subr.mxu0 0.0
  %485 = vmatpush1.msra.mxu0 0.0
  %486 = vmatprep.subr.mxu0 0.0
  %487 = vmatpush1.msra.mxu0 0.0
  %488 = vmatprep.subr.mxu0 0.0
  %489 = vmatpush1.msra.mxu0 0.0
  %490 = vmatprep.subr.mxu0 0.0
  %491 = vmatpush1.msra.mxu0 0.0
  %492 = vmatprep.subr.mxu0 0.0
  %493 = vmatpush1.msra.mxu0 0.0
  %494 = vmatprep.subr.mxu0 0.0
  %495 = vmatpush1.msra.mxu0 0.0
  %496 = vmatprep.subr.mxu0 0.0
  %497 = vmatpush1.msra.mxu0 0.0
  %498 = vmatprep.subr.mxu0 0.0
  %499 = vmatpush1.msra.mxu0 0.0
  %500 = vmatprep.subr.mxu0 0.0
  %501 = vmatpush1.msra.mxu0 0.0
  %502 = vmatprep.subr.mxu0 0.0
  %503 = vmatpush1.msra.mxu0 0.0
  %504 = vmatprep.subr.mxu0 0.0
  %505 = vmatpush1.msra.mxu0 0.0
  %506 = vmatprep.subr.mxu0 0.0
  %507 = vmatpush1.msra.mxu0 0.0
  %508 = vmatprep.subr.mxu0 0.0
  %509 = vmatpush1.msra.mxu0 0.0
  %510 = vmatprep.subr.mxu0 0.0
  %511 = vmatpush1.msra.mxu0 0.0
  %512 = vmatprep.subr.mxu0 0.0
  %513 = vmatpush1.msra.mxu0 0.0
  %514 = vmatprep.mubr.f32.mxu0 0.0
  %515 = vmatmul.mubr.f32.gmra.mrb[0].mxu0 %v377
  %v516 = vpop.f32.mrb[0].mxu0
  %v517 = vadd.f32 %v374, %v516
  %v518 = vpop.f32.mrb[0].mxu0
  %v519 = vadd.f32 %v374, %v518
  %520 = vdwg.mxu0
  %v521 = vmax.f32 %v446, 0.0
  %v522 = vmax.f32 %v448, 0.0
  %v523 = vmax.f32 %v517, 0.0
  %v524 = vmax.f32 %v519, 0.0
  %525 = vst [vmem:[%s2] sm:$0xff] %v521
  %526 = vst [vmem:[%s2 + $0x8] sm:$0xff] %v522
  %527 = vst [vmem:[%s2 + $0x10] sm:$0xff] %v523
  %528 = vst [vmem:[%s2 + $0x18] sm:$0xff] %v524
  // Predicated region
  $region10: #{rpcombi_forward.1} parent=0 // pred_check
    _
  $region11: #{rpcombi_forward.1} parent=0 // pred_check_branch
    %530 = sbr.rel (0) target = $region13
  $region12: #{rpcombi_forward.1} parent=0 // pred_region
    _
  $region13: #{rpcombi_forward.1} parent=0 // pred_fallthru
    _
  // Predicated region
  $region14: #{rpcombi_forward.1} parent=0 // pred_check
    _
  $region15: #{rpcombi_forward.1} parent=0 // pred_check_branch
    %532 = sbr.rel (0) target = $region17
  $region16: #{rpcombi_forward.1} parent=0 // pred_region
    _
  $region17: #{rpcombi_forward.1} parent=0 // pred_fallthru
    _

</llo_original>
